<compile_context>
chip_gen: v6e
topology: v6e:2x2x1
jax: 0.10.0
libtpu: 0.0.40
codegen_flags: <defaults>
</compile_context>

<pallas_src>
import math

import jax
import jax.numpy as jnp
from jax import lax
from jax.experimental import pallas as pl
from jax.experimental.pallas import tpu as pltpu


def _make_kernel(tm, tn, b, n, num_j, split_f32):
    """Build the kernel body for static tile sizes / masking needs."""
    mask_rows = (b % tm) != 0
    mask_cols = (n % tn) != 0

    def kernel(yt_ref, yp_ref, out_ref, tri_ref, carry_ref):
        i = pl.program_id(0)          # batch tile   ("parallel")
        j = pl.program_id(1)          # bins tile    ("arbitrary", carried)

        @pl.when(j == 0)
        def _():
            # Block-local upper-triangular ones; rebuilt per batch tile (a few
            # VPU ops, negligible vs the matmul) so it is always initialized
            # even when the batch axis is split across TensorCores.
            r = lax.broadcasted_iota(jnp.int32, (tn, tn), 0)
            c = lax.broadcasted_iota(jnp.int32, (tn, tn), 1)
            tri_ref[...] = (r <= c).astype(tri_ref.dtype)
            if num_j > 1:
                carry_ref[...] = jnp.zeros_like(carry_ref)

        # Difference in f32 (bf16 inputs are only widened here).
        diff = yt_ref[...].astype(jnp.float32) - yp_ref[...].astype(jnp.float32)

        # In-kernel masking of ragged tiles (replaces wrapper-side jnp.pad).
        if mask_rows:
            row_ix = i * tm + lax.broadcasted_iota(jnp.int32, (tm, tn), 0)
            diff = jnp.where(row_ix < b, diff, 0.0)
        if mask_cols:
            col_ok = (j * tn + lax.broadcasted_iota(jnp.int32, (tm, tn), 1)) < n
            diff = jnp.where(col_ok, diff, 0.0)

        # Block-local cumulative sum along the bins axis on the MXU:
        #   cdf[r, c] = sum_{k <= c} diff[r, k]
        tri = tri_ref[...]
        d_hi = diff.astype(jnp.bfloat16)
        cdf = jnp.dot(d_hi, tri, preferred_element_type=jnp.float32)
        if split_f32:
            # Residual bf16 pass recovers ~16 operand mantissa bits (triangle
            # entries are exact in bf16) for near-f32 accuracy.
            d_lo = (diff - d_hi.astype(jnp.float32)).astype(jnp.bfloat16)
            cdf = cdf + jnp.dot(d_lo, tri, preferred_element_type=jnp.float32)

        if num_j > 1:
            cdf = cdf + carry_ref[...]            # prefix from earlier bin tiles
            carry_ref[...] = cdf[:, tn - 1:tn]    # carry forward row totals

        absd = jnp.abs(cdf)
        if mask_cols:
            absd = jnp.where(col_ok, absd, 0.0)

        # Fold the TM rows 8-at-a-time: pure vreg adds, no per-step XLU
        # sublane reduction; lane-dense (1, 8, TN) store.
        out_ref[...] = jnp.sum(absd.reshape(tm // 8, 8, tn), axis=0)[None]

    return kernel


def _vmem_capacity_bytes():
    try:
        info = pltpu.get_tpu_info()
        cap = getattr(info, "vmem_capacity_bytes", None)
        if cap:
            return int(cap)
    except Exception:
        pass
    return 64 * 1024 * 1024            # conservative default (v7x per-core)


def _choose_tiles(b, n, in_itemsize):
    """Generation-aware tile sizes and scoped-VMEM limit."""
    cap = _vmem_capacity_bytes()
    if cap >= 96 * 1024 * 1024:        # v5e / v6e: 128 MiB physical VMEM
        tile_budget = 56 * 1024 * 1024
        vmem_ceiling = 100 * 1024 * 1024
    else:                              # v7x: 64 MiB per TensorCore
        tile_budget = 22 * 1024 * 1024
        vmem_ceiling = 52 * 1024 * 1024

    # Bins tile: single block for small/medium N, else 256 (MXU-native on
    # v6e/v7x, two passes on v5e) with a carried per-row prefix.
    tn = n if n <= 512 else 256
    num_j = -(-n // tn)

    fixed = 2 * tn * tn                      # resident bf16 triangle scratch
    fixed += 2 * 8 * tn * 4                  # double-buffered (1, 8, TN) output
    per_row = (2 * 2 * tn * in_itemsize      # 2 inputs x 2 pipeline buffers
               + 4 * tn * 4                  # f32 intermediates (diff/hi/lo/cdf)
               + 128 * 4)                    # carried prefix (lane padded)
    max_rows = max(8, (tile_budget - fixed) // per_row)

    tm = int(min(b, 2048, max_rows))
    if tm >= 128:
        tm = (tm // 128) * 128               # MXU-friendly on all generations
    else:
        tm = ((tm + 7) // 8) * 8             # sublane alignment (ragged masked)
    tm = max(tm, 8)

    vmem_needed = fixed + tm * per_row
    vmem_limit = int(min(vmem_ceiling, max(2 * vmem_needed, 32 * 1024 * 1024)))
    return tm, tn, num_j, vmem_limit


def wasserstein_loss(y_true, y_pred):
    """Pallas TPU implementation of WassersteinLoss.forward (scalar mean)."""
    assert y_true.shape == y_pred.shape, (y_true.shape, y_pred.shape)
    n = y_true.shape[-1]
    n_elems = math.prod(y_true.shape)

    # Keep bf16/f32 inputs in their native dtype in HBM (halves DMA for bf16);
    # everything else is widened to f32.
    if y_true.dtype == y_pred.dtype and y_true.dtype in (jnp.bfloat16, jnp.float32):
        in_dtype = y_true.dtype
    else:
        in_dtype = jnp.float32
    yt = jnp.reshape(y_true, (-1, n)).astype(in_dtype)
    yp = jnp.reshape(y_pred, (-1, n)).astype(in_dtype)
    b = yt.shape[0]

    itemsize = jnp.dtype(in_dtype).itemsize
    tm, tn, num_j, vmem_limit = _choose_tiles(b, n, itemsize)
    num_i = -(-b // tm)
    split_f32 = in_dtype != jnp.bfloat16

    kernel = _make_kernel(tm, tn, b, n, num_j, split_f32)

    partial = pl.pallas_call(
        kernel,
        out_shape=jax.ShapeDtypeStruct((num_i, 8, num_j * tn), jnp.float32),
        grid=(num_i, num_j),
        in_specs=[
            pl.BlockSpec((tm, tn), lambda i, j: (i, j)),
            pl.BlockSpec((tm, tn), lambda i, j: (i, j)),
        ],
        out_specs=pl.BlockSpec((1, 8, tn), lambda i, j: (i, 0, j)),
        scratch_shapes=[
            pltpu.VMEM((tn, tn), jnp.bfloat16),   # block-local triangular ones
            pltpu.VMEM((tm, 1), jnp.float32),     # per-row running prefix
        ],
        compiler_params=pltpu.CompilerParams(
            dimension_semantics=("parallel", "arbitrary"),
            vmem_limit_bytes=vmem_limit,
        ),
    )(yt, yp)

    # Final reduce + mean over the ORIGINAL element count (masked padding
    # contributed exact zeros, so the mean is exact).
    return jnp.sum(partial) / jnp.float32(n_elems)


if __name__ == "__main__":
    key = jax.random.PRNGKey(0)
    k1, k2, k3, k4 = jax.random.split(key, 4)

    def ref_loss(y_true, y_pred):
        yt = y_true.astype(jnp.float32)
        yp = y_pred.astype(jnp.float32)
        return jnp.mean(jnp.abs(jnp.cumsum(yt, axis=-1) - jnp.cumsum(yp, axis=-1)))

    # f32, 3-D input (leading dims flattened into the batch axis).
    shape1 = (2, 8, 128)
    y_true1 = jax.random.uniform(k1, shape1, dtype=jnp.float32)
    y_pred1 = jax.random.uniform(k2, shape1, dtype=jnp.float32)
    loss1 = jax.block_until_ready(wasserstein_loss(y_true1, y_pred1))
    ref1 = ref_loss(y_true1, y_pred1)
    assert jnp.allclose(loss1, ref1, rtol=1e-4, atol=1e-4), (loss1, ref1)

    # bf16 inputs stay bf16 in HBM; cumsum runs as a single bf16 MXU pass with
    # f32 accumulation (documented tolerance ~1e-3).
    shape2 = (8, 256)
    y_true2 = jax.random.uniform(k3, shape2, dtype=jnp.float32).astype(jnp.bfloat16)
    y_pred2 = jax.random.uniform(k4, shape2, dtype=jnp.float32).astype(jnp.bfloat16)
    loss2 = jax.block_until_ready(wasserstein_loss(y_true2, y_pred2))
    ref2 = ref_loss(y_true2, y_pred2)
    assert jnp.allclose(loss2, ref2, rtol=2e-3, atol=2e-3), (loss2, ref2)

    print("KERNEL_OK")
</pallas_src>

<mosaic_0001>
module attributes {stable_mosaic.version = 11 : i64} {
  func.func @kernel(%arg0: i32, %arg1: i32, %arg2: memref<16x128xf32, #tpu.memory_space<vmem>>, %arg3: memref<16x128xf32, #tpu.memory_space<vmem>>, %arg4: memref<1x8x128xf32, #tpu.memory_space<vmem>>, %arg5: memref<128x128xbf16, #tpu.memory_space<vmem>>, %arg6: memref<16x1xf32, #tpu.memory_space<vmem>>) attributes {dimension_semantics = [#tpu.dimension_semantics<parallel>, #tpu.dimension_semantics<arbitrary>], iteration_bounds = array<i64: 1, 1>, scalar_prefetch = 0 : i64, scratch_operands = 2 : i64, tpu.core_type = #tpu.core_type<tc>, window_params = [{transform_indices = @transform_0, window_bounds = array<i64: 16, 128>}, {transform_indices = @transform_1, window_bounds = array<i64: 16, 128>}, {transform_indices = @transform_2, window_bounds = array<i64: 1, 8, 128>}]} {
    %c0_i32 = arith.constant 0 : i32
    %0 = arith.cmpi eq, %arg1, %c0_i32 : i32
    %1 = arith.extui %0 : i1 to i32
    %c0_i32_0 = arith.constant 0 : i32
    %2 = arith.cmpi ne, %1, %c0_i32_0 : i32
    scf.if %2 {
      %19 = tpu.iota {dimensions = array<i32: 0>} : vector<128x128xi32>
      %20 = tpu.iota {dimensions = array<i32: 1>} : vector<128x128xi32>
      %21 = arith.cmpi sle, %19, %20 : vector<128x128xi32>
      %22 = arith.extui %21 : vector<128x128xi1> to vector<128x128xi32>
      %23 = arith.sitofp %22 : vector<128x128xi32> to vector<128x128xf32>
      %24 = arith.truncf %23 : vector<128x128xf32> to vector<128x128xbf16>
      %c0_11 = arith.constant 0 : index
      %c0_12 = arith.constant 0 : index
      %25 = vector.load %arg5[%c0_11, %c0_12] : memref<128x128xbf16, #tpu.memory_space<vmem>>, vector<128x128xbf16>
      tpu.vector_store %arg5[%c0_11, %c0_12], %24 {strides = array<i32>} : memref<128x128xbf16, #tpu.memory_space<vmem>>, vector<128x128xbf16>,
    } else {
    }
    %c0 = arith.constant 0 : index
    %c0_1 = arith.constant 0 : index
    %3 = vector.load %arg2[%c0, %c0_1] : memref<16x128xf32, #tpu.memory_space<vmem>>, vector<16x128xf32>
    %c0_2 = arith.constant 0 : index
    %c0_3 = arith.constant 0 : index
    %4 = vector.load %arg3[%c0_2, %c0_3] : memref<16x128xf32, #tpu.memory_space<vmem>>, vector<16x128xf32>
    %5 = arith.subf %3, %4 : vector<16x128xf32>
    %c0_4 = arith.constant 0 : index
    %c0_5 = arith.constant 0 : index
    %6 = vector.load %arg5[%c0_4, %c0_5] : memref<128x128xbf16, #tpu.memory_space<vmem>>, vector<128x128xbf16>
    %7 = arith.truncf %5 : vector<16x128xf32> to vector<16x128xbf16>
    %cst = arith.constant dense<0.000000e+00> : vector<16x128xf32>
    %8 = tpu.matmul %7, %6, %cst {dimension_numbers = #tpu.dot_dimension_numbers<[1], [0], [0], [1], [0, 0, 1, 1], [], []>} : vector<16x128xbf16>, vector<128x128xbf16>, vector<16x128xf32> -> vector<16x128xf32>
    %9 = arith.extf %7 : vector<16x128xbf16> to vector<16x128xf32>
    %10 = arith.subf %5, %9 : vector<16x128xf32>
    %11 = arith.truncf %10 : vector<16x128xf32> to vector<16x128xbf16>
    %cst_6 = arith.constant dense<0.000000e+00> : vector<16x128xf32>
    %12 = tpu.matmul %11, %6, %cst_6 {dimension_numbers = #tpu.dot_dimension_numbers<[1], [0], [0], [1], [0, 0, 1, 1], [], []>} : vector<16x128xbf16>, vector<128x128xbf16>, vector<16x128xf32> -> vector<16x128xf32>
    %13 = arith.addf %8, %12 : vector<16x128xf32>
    %14 = math.absf %13 : vector<16x128xf32>
    %15 = vector.shape_cast %14 : vector<16x128xf32> to vector<2x8x128xf32>
    %cst_7 = arith.constant dense<0.000000e+00> : vector<8x128xf32>
    %16 = vector.multi_reduction <add>, %15, %cst_7 [0] : vector<2x8x128xf32> to vector<8x128xf32>
    %17 = vector.shape_cast %16 : vector<8x128xf32> to vector<1x8x128xf32>
    %c0_8 = arith.constant 0 : index
    %c0_9 = arith.constant 0 : index
    %c0_10 = arith.constant 0 : index
    %18 = vector.load %arg4[%c0_8, %c0_9, %c0_10] : memref<1x8x128xf32, #tpu.memory_space<vmem>>, vector<1x8x128xf32>
    tpu.vector_store %arg4[%c0_8, %c0_9, %c0_10], %17 {strides = array<i32>} : memref<1x8x128xf32, #tpu.memory_space<vmem>>, vector<1x8x128xf32>,
    return
  }
  func.func @transform_0(%arg0: i32, %arg1: i32) -> (i32, i32) {
    %c0_i32 = arith.constant 0 : i32
    return %arg0, %arg1 : i32, i32
  }
  func.func @transform_1(%arg0: i32, %arg1: i32) -> (i32, i32) {
    %c0_i32 = arith.constant 0 : i32
    return %arg0, %arg1 : i32, i32
  }
  func.func @transform_2(%arg0: i32, %arg1: i32) -> (i32, i32, i32) {
    %c0_i32 = arith.constant 0 : i32
    %c0_i32_0 = arith.constant 0 : i32
    return %arg0, %c0_i32, %arg1 : i32, i32, i32
  }
}

</mosaic_0001>

<llo_original>
// kernel: tpu_custom_call.1
$region0: #{tpu_custom_call.1}
  #allocation0 [shape = 'u32[]', space=smem, size = 0x4, offset = 0x4, fixed_abs, tag = 'smem constant byte address 0x4 - core index']
  #allocation1 [shape = 'u32[144,128]{1,0:T(1,128)}', space=vmem, size = 0x12000, scoped, tag = 'internal scratch']
  #allocation2 [shape = 'bf16[128,128]{1,0:T(8,128)(2,1)}', space=vmem, size = 0x8000, scoped, tag = 'scratch operand']
  #allocation3 [shape = 'f32[16,1]{1,0:T(8,128)}', space=vmem, size = 0x2000, scoped, tag = 'scratch operand']
  %s0 = inlined_call_operand.hbm [shape: f32[16,128], index: 0, kind: input, shape index: {}]
  %s1 = inlined_call_operand.hbm [shape: f32[16,128], index: 1, kind: input, shape index: {}]
  %s2 = inlined_call_operand.hbm [shape: f32[1,8,128], index: 2, kind: output, shape index: {}]
  %s3 = sld [smem:[#allocation0]]
  $region30: #{tpu_custom_call.1} parent=0
    _
  %s5 = ssub.s32 1, %s3
  %s6 = scalar_select 0, %s5, %s3
  $region1: #{tpu_custom_call.1} parent=0
    #allocation4 [shape = 'u8[8192]{0}', space=vmem, size = 0x2000, scoped, tag = 'input window, operand 0, single buffered']
    #allocation5 [shape = 's32[1]{0}', space=sflag, size = 0x4, scoped, tag = 'scoped memory for tpu_custom_call.1']
    #allocation6 [shape = 's32[1]{0}', space=sflag, size = 0x4, scoped, tag = 'scoped memory for tpu_custom_call.1']
    #allocation7 [shape = 'u8[8192]{0}', space=vmem, size = 0x2000, scoped, tag = 'input window, operand 1, single buffered']
    #allocation8 [shape = 's32[1]{0}', space=sflag, size = 0x4, scoped, tag = 'scoped memory for tpu_custom_call.1']
    #allocation9 [shape = 'u8[4096]{0}', space=vmem, size = 0x1000, scoped, tag = 'output window, operand 0, single buffered']
    %7 = vsyncpa [#allocation5], 0
    %8 = vsyncpa [#allocation8], 0
    %9 = vsyncpa [#allocation6], 0
    // Predicated region
    $region2: #{tpu_custom_call.1} parent=1 // pred_check
      _
    $region3: #{tpu_custom_call.1} parent=1 // pred_check_branch
      %11 = sbr.rel (0) target = $region5
    $region4: #{tpu_custom_call.1} parent=1 // pred_region
      %s13 = ssub.s32 256, 256
      %14 = vsyncadd [#allocation5], %s13
      %s15 = sshll.u32 [#allocation4], 4
      %s16 = int_to_ptr.vmem [resolvable:$true] %s15
      %21 = dma.hbm_to_vmem [thread:$0]  %s0, 256, %s16, [#allocation5], 128, 128, 8
    $region5: #{tpu_custom_call.1} parent=1 // pred_fallthru
      _
    // Predicated region
    $region6: #{tpu_custom_call.1} parent=1 // pred_check
      _
    $region7: #{tpu_custom_call.1} parent=1 // pred_check_branch
      %23 = sbr.rel (0) target = $region9
    $region8: #{tpu_custom_call.1} parent=1 // pred_region
      %s25 = ssub.s32 256, 256
      %26 = vsyncadd [#allocation8], %s25
      %s27 = sshll.u32 [#allocation7], 4
      %s28 = int_to_ptr.vmem [resolvable:$true] %s27
      %33 = dma.hbm_to_vmem [thread:$0]  %s1, 256, %s28, [#allocation8], 128, 128, 8
    $region9: #{tpu_custom_call.1} parent=1 // pred_fallthru
      _
    // Predicated region
    $region10: #{tpu_custom_call.1} parent=1 // pred_check
      _
    $region11: #{tpu_custom_call.1} parent=1 // pred_check_branch
      %35 = sbr.rel (0) target = $region13
    $region12: #{tpu_custom_call.1} parent=1 // pred_region
      %36 = dma.done [#allocation5], 256
    $region13: #{tpu_custom_call.1} parent=1 // pred_fallthru
      _
    // Predicated region
    $region14: #{tpu_custom_call.1} parent=1 // pred_check
      _
    $region15: #{tpu_custom_call.1} parent=1 // pred_check_branch
      %38 = sbr.rel (0) target = $region17
    $region16: #{tpu_custom_call.1} parent=1 // pred_region
      %39 = dma.done [#allocation8], 256
    $region17: #{tpu_custom_call.1} parent=1 // pred_fallthru
      _
    %p41 = scmp.eq.s32.totalorder 0, 0
    // Predicated region
    $region18: #{tpu_custom_call.1} parent=1 // pred_check
      %p42 = pneg %p41
    $region19: #{tpu_custom_call.1} parent=1 // pred_check_branch
      %44 = sbr.rel (%p42) target = $region21
    $region20: #{tpu_custom_call.1} parent=1 // pred_region
      %v45 = vlaneseq
      %v46 = vshrl.u32 %v45, 7
      %v47 = vadd.s32 %v46, 8
      %v48 = vadd.s32 %v46, 16
      %v49 = vadd.s32 %v46, 24
      %v50 = vadd.s32 %v46, 32
      %v51 = vadd.s32 %v46, 40
      %v52 = vadd.s32 %v46, 48
      %v53 = vadd.s32 %v46, 56
      %v54 = vadd.s32 %v46, 64
      %v55 = vadd.s32 %v46, 72
      %v56 = vadd.s32 %v46, 80
      %v57 = vadd.s32 %v46, 88
      %v58 = vadd.s32 %v46, 96
      %v59 = vadd.s32 %v46, 104
      %v60 = vadd.s32 %v46, 112
      %v61 = vadd.s32 %v46, 120
      %v62 = vlaneseq
      %v63 = vand.u32 %v62, 127
      %vm64 = vcmp.le.s32.totalorder %v46, %v63
      %vm65 = vcmp.le.s32.totalorder %v47, %v63
      %vm66 = vcmp.le.s32.totalorder %v48, %v63
      %vm67 = vcmp.le.s32.totalorder %v49, %v63
      %vm68 = vcmp.le.s32.totalorder %v50, %v63
      %vm69 = vcmp.le.s32.totalorder %v51, %v63
      %vm70 = vcmp.le.s32.totalorder %v52, %v63
      %vm71 = vcmp.le.s32.totalorder %v53, %v63
      %vm72 = vcmp.le.s32.totalorder %v54, %v63
      %vm73 = vcmp.le.s32.totalorder %v55, %v63
      %vm74 = vcmp.le.s32.totalorder %v56, %v63
      %vm75 = vcmp.le.s32.totalorder %v57, %v63
      %vm76 = vcmp.le.s32.totalorder %v58, %v63
      %vm77 = vcmp.le.s32.totalorder %v59, %v63
      %vm78 = vcmp.le.s32.totalorder %v60, %v63
      %vm79 = vcmp.le.s32.totalorder %v61, %v63
      %v80 = vsel %vm64, 1, 0
      %v81 = vsel %vm65, 1, 0
      %v82 = vsel %vm66, 1, 0
      %v83 = vsel %vm67, 1, 0
      %v84 = vsel %vm68, 1, 0
      %v85 = vsel %vm69, 1, 0
      %v86 = vsel %vm70, 1, 0
      %v87 = vsel %vm71, 1, 0
      %v88 = vsel %vm72, 1, 0
      %v89 = vsel %vm73, 1, 0
      %v90 = vsel %vm74, 1, 0
      %v91 = vsel %vm75, 1, 0
      %v92 = vsel %vm76, 1, 0
      %v93 = vsel %vm77, 1, 0
      %v94 = vsel %vm78, 1, 0
      %v95 = vsel %vm79, 1, 0
      %v96 = vcvt.s32.f32 %v80
      %v97 = vcvt.s32.f32 %v81
      %v98 = vcvt.s32.f32 %v82
      %v99 = vcvt.s32.f32 %v83
      %v100 = vcvt.s32.f32 %v84
      %v101 = vcvt.s32.f32 %v85
      %v102 = vcvt.s32.f32 %v86
      %v103 = vcvt.s32.f32 %v87
      %v104 = vcvt.s32.f32 %v88
      %v105 = vcvt.s32.f32 %v89
      %v106 = vcvt.s32.f32 %v90
      %v107 = vcvt.s32.f32 %v91
      %v108 = vcvt.s32.f32 %v92
      %v109 = vcvt.s32.f32 %v93
      %v110 = vcvt.s32.f32 %v94
      %v111 = vcvt.s32.f32 %v95
      %v112 = vpack.c.bf16 %v97, %v96
      %v113 = vpack.c.bf16 %v99, %v98
      %v114 = vpack.c.bf16 %v101, %v100
      %v115 = vpack.c.bf16 %v103, %v102
      %v116 = vpack.c.bf16 %v105, %v104
      %v117 = vpack.c.bf16 %v107, %v106
      %v118 = vpack.c.bf16 %v109, %v108
      %v119 = vpack.c.bf16 %v111, %v110
      %v128 = vunpack.c.l.b16 %v112
      %v129 = vunpack.c.h.b16 %v112
      %v130 = vunpack.c.l.b16 %v113
      %v131 = vunpack.c.h.b16 %v113
      %v132 = vunpack.c.l.b16 %v114
      %v133 = vunpack.c.h.b16 %v114
      %v134 = vunpack.c.l.b16 %v115
      %v135 = vunpack.c.h.b16 %v115
      %v136 = vunpack.c.l.b16 %v116
      %v137 = vunpack.c.h.b16 %v116
      %v138 = vunpack.c.l.b16 %v117
      %v139 = vunpack.c.h.b16 %v117
      %v140 = vunpack.c.l.b16 %v118
      %v141 = vunpack.c.h.b16 %v118
      %v142 = vunpack.c.l.b16 %v119
      %v143 = vunpack.c.h.b16 %v119
      %v144 = vpack.c.b16 %v128, %v128
      %v145 = vpack.c.b16 %v129, %v129
      %v146 = vpack.c.b16 %v130, %v130
      %v147 = vpack.c.b16 %v131, %v131
      %v148 = vpack.c.b16 %v132, %v132
      %v149 = vpack.c.b16 %v133, %v133
      %v150 = vpack.c.b16 %v134, %v134
      %v151 = vpack.c.b16 %v135, %v135
      %v152 = vpack.c.b16 %v136, %v136
      %v153 = vpack.c.b16 %v137, %v137
      %v154 = vpack.c.b16 %v138, %v138
      %v155 = vpack.c.b16 %v139, %v139
      %v156 = vpack.c.b16 %v140, %v140
      %v157 = vpack.c.b16 %v141, %v141
      %v158 = vpack.c.b16 %v142, %v142
      %v159 = vpack.c.b16 %v143, %v143
      %176 = vst [vmem:[#allocation2] sm:$0xf] %v144
      %177 = vst [vmem:[#allocation2 + $0x4] sm:$0xf] %v145
      %178 = vst [vmem:[#allocation2 + $0x8] sm:$0xf] %v146
      %179 = vst [vmem:[#allocation2 + $0xc] sm:$0xf] %v147
      %180 = vst [vmem:[#allocation2 + $0x10] sm:$0xf] %v148
      %181 = vst [vmem:[#allocation2 + $0x14] sm:$0xf] %v149
      %182 = vst [vmem:[#allocation2 + $0x18] sm:$0xf] %v150
      %183 = vst [vmem:[#allocation2 + $0x1c] sm:$0xf] %v151
      %184 = vst [vmem:[#allocation2 + $0x20] sm:$0xf] %v152
      %185 = vst [vmem:[#allocation2 + $0x24] sm:$0xf] %v153
      %186 = vst [vmem:[#allocation2 + $0x28] sm:$0xf] %v154
      %187 = vst [vmem:[#allocation2 + $0x2c] sm:$0xf] %v155
      %188 = vst [vmem:[#allocation2 + $0x30] sm:$0xf] %v156
      %189 = vst [vmem:[#allocation2 + $0x34] sm:$0xf] %v157
      %190 = vst [vmem:[#allocation2 + $0x38] sm:$0xf] %v158
      %191 = vst [vmem:[#allocation2 + $0x3c] sm:$0xf] %v159
    $region21: #{tpu_custom_call.1} parent=1 // pred_fallthru
      _
    %v192 = vld [vmem:[#allocation4] sm:$0xff]
    %v193 = vld [vmem:[#allocation4 + $0x8] sm:$0xff]
    %v194 = vld [vmem:[#allocation7] sm:$0xff]
    %v195 = vld [vmem:[#allocation7 + $0x8] sm:$0xff]
    %v196 = vsub.f32 %v192, %v194
    %v197 = vsub.f32 %v193, %v195
    %v198 = vld [vmem:[#allocation2] sm:$0xf]
    %v199 = vld [vmem:[#allocation2 + $0x4] sm:$0xf]
    %v200 = vld [vmem:[#allocation2 + $0x8] sm:$0xf]
    %v201 = vld [vmem:[#allocation2 + $0xc] sm:$0xf]
    %v202 = vld [vmem:[#allocation2 + $0x10] sm:$0xf]
    %v203 = vld [vmem:[#allocation2 + $0x14] sm:$0xf]
    %v204 = vld [vmem:[#allocation2 + $0x18] sm:$0xf]
    %v205 = vld [vmem:[#allocation2 + $0x1c] sm:$0xf]
    %v206 = vld [vmem:[#allocation2 + $0x20] sm:$0xf]
    %v207 = vld [vmem:[#allocation2 + $0x24] sm:$0xf]
    %v208 = vld [vmem:[#allocation2 + $0x28] sm:$0xf]
    %v209 = vld [vmem:[#allocation2 + $0x2c] sm:$0xf]
    %v210 = vld [vmem:[#allocation2 + $0x30] sm:$0xf]
    %v211 = vld [vmem:[#allocation2 + $0x34] sm:$0xf]
    %v212 = vld [vmem:[#allocation2 + $0x38] sm:$0xf]
    %v213 = vld [vmem:[#allocation2 + $0x3c] sm:$0xf]
    %v214 = vpack.c.bf16 %v197, %v196
    %v215 = vunpack.c.l.bf16 %v214
    %v216 = vunpack.c.h.bf16 %v214
    %v217 = vsub.f32 %v196, %v215
    %v218 = vsub.f32 %v197, %v216
    %v219 = vpack.c.bf16 %v218, %v217
    %v236 = vunpack.c.l.b16 %v198
    %v237 = vunpack.c.l.b16 %v199
    %v238 = vunpack.c.l.b16 %v200
    %v239 = vunpack.c.l.b16 %v201
    %v240 = vunpack.c.l.b16 %v202
    %v241 = vunpack.c.l.b16 %v203
    %v242 = vunpack.c.l.b16 %v204
    %v243 = vunpack.c.l.b16 %v205
    %v244 = vunpack.c.l.b16 %v206
    %v245 = vunpack.c.l.b16 %v207
    %v246 = vunpack.c.l.b16 %v208
    %v247 = vunpack.c.l.b16 %v209
    %v248 = vunpack.c.l.b16 %v210
    %v249 = vunpack.c.l.b16 %v211
    %v250 = vunpack.c.l.b16 %v212
    %v251 = vunpack.c.l.b16 %v213
    %v252 = vpack.c.b16 %v237, %v236
    %v253 = vpack.c.b16 %v239, %v238
    %v254 = vpack.c.b16 %v241, %v240
    %v255 = vpack.c.b16 %v243, %v242
    %v256 = vpack.c.b16 %v245, %v244
    %v257 = vpack.c.b16 %v247, %v246
    %v258 = vpack.c.b16 %v249, %v248
    %v259 = vpack.c.b16 %v251, %v250
    %268 = vmatprep.subr.bf16.mxu0 0
    %269 = vmatpush1.bf16.msra.mxu0 %v259
    %270 = vmatprep.subr.bf16.mxu0 0
    %271 = vmatpush1.bf16.msra.mxu0 %v258
    %272 = vmatprep.subr.bf16.mxu0 0
    %273 = vmatpush1.bf16.msra.mxu0 %v257
    %274 = vmatprep.subr.bf16.mxu0 0
    %275 = vmatpush1.bf16.msra.mxu0 %v256
    %276 = vmatprep.subr.bf16.mxu0 0
    %277 = vmatpush1.bf16.msra.mxu0 %v255
    %278 = vmatprep.subr.bf16.mxu0 0
    %279 = vmatpush1.bf16.msra.mxu0 %v254
    %280 = vmatprep.subr.bf16.mxu0 0
    %281 = vmatpush1.bf16.msra.mxu0 %v253
    %282 = vmatprep.subr.bf16.mxu0 0
    %283 = vmatpush1.bf16.msra.mxu0 %v252
    %284 = vmatprep.subr.bf16.mxu0 0
    %285 = vmatpush2.bf16.msra.mxu0 0
    %286 = vmatprep.subr.bf16.mxu0 0
    %287 = vmatpush2.bf16.msra.mxu0 0
    %288 = vmatprep.subr.bf16.mxu0 0
    %289 = vmatpush2.bf16.msra.mxu0 0
    %290 = vmatprep.subr.bf16.mxu0 0
    %291 = vmatpush2.bf16.msra.mxu0 0
    %292 = vmatprep.subr.bf16.mxu0 0
    %293 = vmatpush2.bf16.msra.mxu0 0
    %294 = vmatprep.subr.bf16.mxu0 0
    %295 = vmatpush2.bf16.msra.mxu0 0
    %296 = vmatprep.subr.bf16.mxu0 0
    %297 = vmatpush2.bf16.msra.mxu0 0
    %298 = vmatprep.subr.bf16.mxu0 0
    %299 = vmatpush2.bf16.msra.mxu0 0
    %300 = vmatprep.mubr.bf16.mxu0 0
    %301 = vmatmul.mubr.bf16.gmra.mxu0 %v219
    %v302 = vpop.f32.mrf.mxu0
    %v303 = vadd.f32 0.0, %v302
    %v304 = vpop.f32.mrf.mxu0
    %v305 = vpop.f32.mrf.mxu0
    %v306 = vadd.f32 0.0, %v305
    %v307 = vpop.f32.mrf.mxu0
    %308 = vdwg.mxu0
    %309 = vmatprep.subr.bf16.mxu0 0
    %310 = vmatpush1.bf16.msra.mxu0 %v259
    %311 = vmatprep.subr.bf16.mxu0 0
    %312 = vmatpush1.bf16.msra.mxu0 %v258
    %313 = vmatprep.subr.bf16.mxu0 0
    %314 = vmatpush1.bf16.msra.mxu0 %v257
    %315 = vmatprep.subr.bf16.mxu0 0
    %316 = vmatpush1.bf16.msra.mxu0 %v256
    %317 = vmatprep.subr.bf16.mxu0 0
    %318 = vmatpush1.bf16.msra.mxu0 %v255
    %319 = vmatprep.subr.bf16.mxu0 0
    %320 = vmatpush1.bf16.msra.mxu0 %v254
    %321 = vmatprep.subr.bf16.mxu0 0
    %322 = vmatpush1.bf16.msra.mxu0 %v253
    %323 = vmatprep.subr.bf16.mxu0 0
    %324 = vmatpush1.bf16.msra.mxu0 %v252
    %325 = vmatprep.subr.bf16.mxu0 0
    %326 = vmatpush2.bf16.msra.mxu0 0
    %327 = vmatprep.subr.bf16.mxu0 0
    %328 = vmatpush2.bf16.msra.mxu0 0
    %329 = vmatprep.subr.bf16.mxu0 0
    %330 = vmatpush2.bf16.msra.mxu0 0
    %331 = vmatprep.subr.bf16.mxu0 0
    %332 = vmatpush2.bf16.msra.mxu0 0
    %333 = vmatprep.subr.bf16.mxu0 0
    %334 = vmatpush2.bf16.msra.mxu0 0
    %335 = vmatprep.subr.bf16.mxu0 0
    %336 = vmatpush2.bf16.msra.mxu0 0
    %337 = vmatprep.subr.bf16.mxu0 0
    %338 = vmatpush2.bf16.msra.mxu0 0
    %339 = vmatprep.subr.bf16.mxu0 0
    %340 = vmatpush2.bf16.msra.mxu0 0
    %341 = vmatprep.mubr.bf16.mxu0 0
    %342 = vmatmul.mubr.bf16.gmra.mxu0 %v214
    %v343 = vpop.f32.mrf.mxu0
    %v344 = vadd.f32 %v303, %v343
    %v345 = vpop.f32.mrf.mxu0
    %v346 = vpop.f32.mrf.mxu0
    %v347 = vadd.f32 %v306, %v346
    %v348 = vpop.f32.mrf.mxu0
    %349 = vdwg.mxu0
    %v350 = vand.u32 2147483647, %v344
    %v351 = vand.u32 2147483647, %v347
    %v352 = vadd.f32 %v350, %v351
    %353 = vst [vmem:[#allocation9] sm:$0xff] %v352
    // Predicated region
    $region22: #{tpu_custom_call.1} parent=1 // pred_check
      _
    $region23: #{tpu_custom_call.1} parent=1 // pred_check_branch
      %355 = sbr.rel (0) target = $region25
    $region24: #{tpu_custom_call.1} parent=1 // pred_region
      %s357 = ssub.s32 128, 128
      %358 = vsyncadd [#allocation6], %s357
      %s360 = sshll.u32 [#allocation9], 4
      %s361 = int_to_ptr.vmem [resolvable:$true] %s360
      %363 = dma.vmem_to_hbm [thread:$0]  %s361, 128, %s2, [#allocation6]
    $region25: #{tpu_custom_call.1} parent=1 // pred_fallthru
      _
    // Predicated region
    $region26: #{tpu_custom_call.1} parent=1 // pred_check
      _
    $region27: #{tpu_custom_call.1} parent=1 // pred_check_branch
      %365 = sbr.rel (0) target = $region29
    $region28: #{tpu_custom_call.1} parent=1 // pred_region
      %366 = dma.done [#allocation6], 128
    $region29: #{tpu_custom_call.1} parent=1 // pred_fallthru
      _
    %367 = vsyncpa [#allocation5], 1
    %368 = vsyncpa [#allocation8], 1
    %369 = vsyncpa [#allocation6], 1

</llo_original>
